<compile_context>
chip_gen: v6e
topology: v6e:2x2x1
jax: 0.10.0
libtpu: 0.0.40
codegen_flags: <defaults>
</compile_context>

<pallas_src>
import functools

import jax
import jax.numpy as jnp
from jax import lax
from jax.experimental import pallas as pl
from jax.experimental.pallas import tpu as pltpu


def _round_up(x, m):
    return (x + m - 1) // m * m


def _tpu_kind():
    try:
        return jax.devices()[0].device_kind.lower()
    except Exception:
        return ""


def _vmem_budget_bytes():
    # ~75% of physical VMEM: leaves compiler-internal scratch headroom.
    # v5e/v6e (128 MiB) -> ~96 MiB; v7x (64 MiB per TC) -> ~48 MiB.
    try:
        phys = int(pltpu.get_tpu_info().vmem_capacity_bytes)
    except Exception:
        phys = 64 << 20  # conservative fallback (v7x-sized)
    return int(phys * 3 // 4)


def _gelu(h, exact):
    if exact:
        # Exact erf GELU — matches PyTorch nn.GELU() default.
        return 0.5 * h * (1.0 + lax.erf(h * 0.7071067811865476))
    # tanh approximation: transcendental goes to the (otherwise idle) EUP slot.
    # Numerically differs slightly from nn.GELU() default — opt-in only.
    return jax.nn.gelu(h, approximate=True)


def _ffn_fused_kernel(x_ref, w1_ref, b1_ref, w2_ref, b2_ref, o_ref, *, exact_gelu):
    # Full (padded) W1/W2 are VMEM-resident; grid iterates over row tiles only.
    # x_ref: (tm, Dp)  w1_ref: (Dp, Hp)  b1_ref: (1, Hp)
    # w2_ref: (Hp, Dp) b2_ref: (1, Dp)   o_ref: (tm, Dp)
    h = jnp.dot(x_ref[...], w1_ref[...], preferred_element_type=jnp.float32)
    h = _gelu(h + b1_ref[...], exact_gelu)
    # Dropout is identity at inference time.
    y = jnp.dot(h.astype(w2_ref.dtype), w2_ref[...], preferred_element_type=jnp.float32)
    o_ref[...] = (y + b2_ref[...]).astype(o_ref.dtype)


def _ffn_reduce_kernel(x_ref, w1_ref, b1_ref, w2_ref, b2_ref, o_ref, acc_ref, *,
                       exact_gelu):
    # Hidden dim tiled as trailing "arbitrary" reduction axis (P3 pattern).
    # acc_ref: (tm, Dp) f32 scratch, resident across the k axis.
    k = pl.program_id(1)
    h = jnp.dot(x_ref[...], w1_ref[...], preferred_element_type=jnp.float32)
    h = _gelu(h + b1_ref[...], exact_gelu)
    partial = jnp.dot(h.astype(w2_ref.dtype), w2_ref[...],
                      preferred_element_type=jnp.float32)

    @pl.when(k == 0)
    def _():
        acc_ref[...] = partial          # direct store: no zero-fill RMW

    @pl.when(k > 0)
    def _():
        acc_ref[...] += partial

    @pl.when(k == pl.num_programs(1) - 1)
    def _():
        o_ref[...] = (acc_ref[...] + b2_ref[...]).astype(o_ref.dtype)


def advanced_feed_forward(x, w1, b1, w2, b2, *, compute_dtype=None, exact_gelu=True):
    """x: [B, S, d_model] -> [B, S, d_model].  Inference forward of AdvancedFeedForward."""
    B, S, d_model = x.shape
    d_hidden = w1.shape[1]
    M = B * S
    out_dtype = x.dtype

    kind = _tpu_kind()
    newer_gen = any(tag in kind for tag in ("v6", "v7", "trillium"))
    if compute_dtype is None:
        # bf16 MXU operands on v6e/v7x (f32 accumulation kept); f32 elsewhere.
        compute_dtype = jnp.bfloat16 if newer_gen else x.dtype
    compute_dtype = jnp.dtype(compute_dtype)
    cds = compute_dtype.itemsize
    ods = jnp.dtype(out_dtype).itemsize

    def pad_dim(d):
        p = _round_up(d, 128)
        # 256-aligned contraction dims on v6e/v7x when padding overhead < ~10%.
        if newer_gen and p % 256 != 0 and p >= 1280:
            p += 128
        return p

    Dp = pad_dim(d_model)
    Hp = pad_dim(d_hidden)

    budget = _vmem_budget_bytes()
    headroom = 2 << 20

    def fused_bytes(tm):
        return (2 * tm * Dp * (cds + ods)           # x / out tiles (double-buffered)
                + 2 * 2 * Dp * Hp * cds             # w1 + w2 buffers
                + 2 * (Hp + Dp) * 4                 # biases (f32)
                + tm * Hp * 4 + tm * Dp * 4         # f32 h / y temporaries
                + headroom)

    def reduce_bytes(tm, th):
        return (2 * (tm * Dp * cds + Dp * th * cds + th * Dp * cds
                     + (th + Dp) * 4 + tm * Dp * ods)
                + tm * Dp * 4                       # accumulator scratch
                + tm * th * 4 + tm * Dp * 4         # f32 h / partial temporaries
                + headroom)

    # Row-tile candidates (largest first).
    if M < 128:
        tm_candidates = [_round_up(max(M, 1), 16)]
    else:
        tm_candidates = [t for t in (512, 256, 128) if t <= _round_up(M, 128)]

    tm = th = None
    fused = False
    fused_fit = [t for t in tm_candidates if fused_bytes(t) <= budget]
    if fused_fit:
        fused = True
        # Prefer >= 2 row tiles so the "parallel" M axis feeds both v7x TCs.
        two_tile = [t for t in fused_fit if pl.cdiv(M, t) >= 2]
        tm = two_tile[0] if two_tile else fused_fit[0]
        th = Hp
    else:
        th_candidates = [t for t in (1024, 512, 256, 128) if t <= Hp and Hp % t == 0]
        for t_m in tm_candidates:                 # largest tm first: less re-streaming
            for t_h in th_candidates:
                if reduce_bytes(t_m, t_h) <= budget:
                    tm, th = t_m, t_h
                    break
            if tm is not None:
                break
        if tm is None:
            tm, th = tm_candidates[-1], 128       # last resort (may exceed soft budget)

    Mp = _round_up(M, tm)

    # Pad / cast only when necessary (zero-padding is inert: GELU(0) rows are
    # discarded, padded weight rows/cols are 0).
    x_flat = x.reshape(M, d_model)
    if Mp == M and Dp == d_model:
        x2 = x_flat.astype(compute_dtype)
    else:
        x2 = jnp.zeros((Mp, Dp), compute_dtype).at[:M, :d_model].set(
            x_flat.astype(compute_dtype))

    # NOTE: weights are static across calls — in a full model pre-pad/cast them
    # once outside this function; here the copy is skipped when already aligned.
    if (Dp, Hp) == (d_model, d_hidden):
        w1p = w1.astype(compute_dtype)
        w2p = w2.astype(compute_dtype)
        b1p = b1.reshape(1, Hp).astype(jnp.float32)
        b2p = b2.reshape(1, Dp).astype(jnp.float32)
    else:
        w1p = jnp.zeros((Dp, Hp), compute_dtype).at[:d_model, :d_hidden].set(
            w1.astype(compute_dtype))
        w2p = jnp.zeros((Hp, Dp), compute_dtype).at[:d_hidden, :d_model].set(
            w2.astype(compute_dtype))
        b1p = jnp.zeros((1, Hp), jnp.float32).at[0, :d_hidden].set(b1.astype(jnp.float32))
        b2p = jnp.zeros((1, Dp), jnp.float32).at[0, :d_model].set(b2.astype(jnp.float32))

    out_shape = jax.ShapeDtypeStruct((Mp, Dp), out_dtype)

    if fused:
        out2 = pl.pallas_call(
            functools.partial(_ffn_fused_kernel, exact_gelu=exact_gelu),
            out_shape=out_shape,
            grid=(Mp // tm,),
            in_specs=[
                pl.BlockSpec((tm, Dp), lambda i: (i, 0)),   # x rows
                pl.BlockSpec((Dp, Hp), lambda i: (0, 0)),   # w1 — fetched once
                pl.BlockSpec((1, Hp), lambda i: (0, 0)),    # b1
                pl.BlockSpec((Hp, Dp), lambda i: (0, 0)),   # w2 — fetched once
                pl.BlockSpec((1, Dp), lambda i: (0, 0)),    # b2
            ],
            out_specs=pl.BlockSpec((tm, Dp), lambda i: (i, 0)),
            compiler_params=pltpu.CompilerParams(
                dimension_semantics=("parallel",),
                vmem_limit_bytes=budget,
            ),
        )(x2, w1p, b1p, w2p, b2p)
    else:
        out2 = pl.pallas_call(
            functools.partial(_ffn_reduce_kernel, exact_gelu=exact_gelu),
            out_shape=out_shape,
            grid=(Mp // tm, Hp // th),
            in_specs=[
                pl.BlockSpec((tm, Dp), lambda i, k: (i, 0)),   # x rows
                pl.BlockSpec((Dp, th), lambda i, k: (0, k)),   # w1 hidden slab
                pl.BlockSpec((1, th), lambda i, k: (0, k)),    # b1 hidden slab
                pl.BlockSpec((th, Dp), lambda i, k: (k, 0)),   # w2 hidden slab
                pl.BlockSpec((1, Dp), lambda i, k: (0, 0)),    # b2
            ],
            out_specs=pl.BlockSpec((tm, Dp), lambda i, k: (i, 0)),
            scratch_shapes=[pltpu.VMEM((tm, Dp), jnp.float32)],
            compiler_params=pltpu.CompilerParams(
                dimension_semantics=("parallel", "arbitrary"),
                vmem_limit_bytes=budget,
            ),
        )(x2, w1p, b1p, w2p, b2p)

    if Mp == M and Dp == d_model:
        return out2.reshape(B, S, d_model)
    return out2[:M, :d_model].reshape(B, S, d_model)


def _reference(x, w1, b1, w2, b2):
    hi = jax.lax.Precision.HIGHEST
    h = jnp.einsum("bsd,dh->bsh", x, w1, precision=hi) + b1
    h = 0.5 * h * (1.0 + lax.erf(h / jnp.sqrt(2.0)))
    return jnp.einsum("bsh,hd->bsd", h, w2, precision=hi) + b2


def _make_case(key, B, S, d_model, d_hidden):
    kx, k1, kb1, k2, kb2 = jax.random.split(key, 5)
    x = jax.random.normal(kx, (B, S, d_model), dtype=jnp.float32)
    w1 = jax.random.normal(k1, (d_model, d_hidden), jnp.float32) / jnp.sqrt(d_model)
    b1 = jax.random.normal(kb1, (d_hidden,), jnp.float32) * 0.01
    w2 = jax.random.normal(k2, (d_hidden, d_model), jnp.float32) / jnp.sqrt(d_hidden)
    b2 = jax.random.normal(kb2, (d_model,), jnp.float32) * 0.01
    return x, w1, b1, w2, b2


if __name__ == "__main__":
    key = jax.random.PRNGKey(0)
    k_a, k_b = jax.random.split(key)

    # Case 1: small module shapes (batch=2, seq=8, d_model=32, d_hidden=64).
    x, w1, b1, w2, b2 = _make_case(k_a, 2, 8, 32, 64)
    ref = _reference(x, w1, b1, w2, b2)

    out_f32 = jax.block_until_ready(
        advanced_feed_forward(x, w1, b1, w2, b2, compute_dtype=jnp.float32))
    assert out_f32.shape == (2, 8, 32)
    assert jnp.allclose(out_f32, ref, atol=1e-4, rtol=1e-4), "case1 f32 mismatch"

    out_def = jax.block_until_ready(advanced_feed_forward(x, w1, b1, w2, b2))
    assert jnp.allclose(out_def, ref, atol=5e-2, rtol=5e-2), "case1 default mismatch"

    out_bf16 = jax.block_until_ready(
        advanced_feed_forward(x, w1, b1, w2, b2, compute_dtype=jnp.bfloat16))
    assert jnp.allclose(out_bf16, ref, atol=5e-2, rtol=5e-2), "case1 bf16 mismatch"

    # Case 2: lane-aligned dims + multiple row tiles (exercises the fused,
    # no-padding, grid[0] >= 2 path).  batch=2, seq=128, d_model=128, d_hidden=256.
    x2, w12, b12, w22, b22 = _make_case(k_b, 2, 128, 128, 256)
    ref2 = _reference(x2, w12, b12, w22, b22)

    out2_f32 = jax.block_until_ready(
        advanced_feed_forward(x2, w12, b12, w22, b22, compute_dtype=jnp.float32))
    assert out2_f32.shape == (2, 128, 128)
    assert jnp.allclose(out2_f32, ref2, atol=1e-3, rtol=1e-3), "case2 f32 mismatch"

    out2_def = jax.block_until_ready(advanced_feed_forward(x2, w12, b12, w22, b22))
    assert jnp.allclose(out2_def, ref2, atol=1e-1, rtol=1e-1), "case2 default mismatch"

    # TODO(synk): training-mode Dropout (RNG masking) not implemented; inference-only.
    print("KERNEL_OK")
</pallas_src>

<mosaic_0001>
module attributes {stable_mosaic.version = 11 : i64} {
  func.func @_ffn_fused_kernel(%arg0: i32, %arg1: memref<16x128xf32, #tpu.memory_space<vmem>>, %arg2: memref<128x128xf32, #tpu.memory_space<vmem>>, %arg3: memref<1x128xf32, #tpu.memory_space<vmem>>, %arg4: memref<128x128xf32, #tpu.memory_space<vmem>>, %arg5: memref<1x128xf32, #tpu.memory_space<vmem>>, %arg6: memref<16x128xf32, #tpu.memory_space<vmem>>) attributes {dimension_semantics = [#tpu.dimension_semantics<parallel>], iteration_bounds = array<i64: 1>, scalar_prefetch = 0 : i64, scratch_operands = 0 : i64, tpu.core_type = #tpu.core_type<tc>, window_params = [{transform_indices = @transform_0, window_bounds = array<i64: 16, 128>}, {pipeline_mode = #tpu.pipeline_mode<synchronous>, transform_indices = @transform_1, window_bounds = array<i64: 128, 128>}, {pipeline_mode = #tpu.pipeline_mode<synchronous>, transform_indices = @transform_2, window_bounds = array<i64: 1, 128>}, {pipeline_mode = #tpu.pipeline_mode<synchronous>, transform_indices = @transform_3, window_bounds = array<i64: 128, 128>}, {pipeline_mode = #tpu.pipeline_mode<synchronous>, transform_indices = @transform_4, window_bounds = array<i64: 1, 128>}, {transform_indices = @transform_5, window_bounds = array<i64: 16, 128>}]} {
    %c0 = arith.constant 0 : index
    %c0_0 = arith.constant 0 : index
    %0 = vector.load %arg1[%c0, %c0_0] : memref<16x128xf32, #tpu.memory_space<vmem>>, vector<16x128xf32>
    %c0_1 = arith.constant 0 : index
    %c0_2 = arith.constant 0 : index
    %1 = vector.load %arg2[%c0_1, %c0_2] : memref<128x128xf32, #tpu.memory_space<vmem>>, vector<128x128xf32>
    %cst = arith.constant dense<0.000000e+00> : vector<16x128xf32>
    %2 = tpu.matmul %0, %1, %cst {dimension_numbers = #tpu.dot_dimension_numbers<[1], [0], [0], [1], [0, 0, 1, 1], [], []>} : vector<16x128xf32>, vector<128x128xf32>, vector<16x128xf32> -> vector<16x128xf32>
    %c0_3 = arith.constant 0 : index
    %c0_4 = arith.constant 0 : index
    %3 = vector.load %arg3[%c0_3, %c0_4] : memref<1x128xf32, #tpu.memory_space<vmem>>, vector<1x128xf32>
    %4 = vector.broadcast %3 : vector<1x128xf32> to vector<16x128xf32>
    %5 = arith.addf %2, %4 : vector<16x128xf32>
    %cst_5 = arith.constant 5.000000e-01 : f32
    %6 = vector.broadcast %cst_5 : f32 to vector<16x128xf32>
    %7 = arith.mulf %6, %5 : vector<16x128xf32>
    %cst_6 = arith.constant 0.707106769 : f32
    %8 = vector.broadcast %cst_6 : f32 to vector<16x128xf32>
    %9 = arith.mulf %5, %8 : vector<16x128xf32>
    %10 = math.erf %9 : vector<16x128xf32>
    %cst_7 = arith.constant 1.000000e+00 : f32
    %11 = vector.broadcast %cst_7 : f32 to vector<16x128xf32>
    %12 = arith.addf %11, %10 : vector<16x128xf32>
    %13 = arith.mulf %7, %12 : vector<16x128xf32>
    %c0_8 = arith.constant 0 : index
    %c0_9 = arith.constant 0 : index
    %14 = vector.load %arg4[%c0_8, %c0_9] : memref<128x128xf32, #tpu.memory_space<vmem>>, vector<128x128xf32>
    %cst_10 = arith.constant dense<0.000000e+00> : vector<16x128xf32>
    %15 = tpu.matmul %13, %14, %cst_10 {dimension_numbers = #tpu.dot_dimension_numbers<[1], [0], [0], [1], [0, 0, 1, 1], [], []>} : vector<16x128xf32>, vector<128x128xf32>, vector<16x128xf32> -> vector<16x128xf32>
    %c0_11 = arith.constant 0 : index
    %c0_12 = arith.constant 0 : index
    %16 = vector.load %arg5[%c0_11, %c0_12] : memref<1x128xf32, #tpu.memory_space<vmem>>, vector<1x128xf32>
    %17 = vector.broadcast %16 : vector<1x128xf32> to vector<16x128xf32>
    %18 = arith.addf %15, %17 : vector<16x128xf32>
    %c0_13 = arith.constant 0 : index
    %c0_14 = arith.constant 0 : index
    %19 = vector.load %arg6[%c0_13, %c0_14] : memref<16x128xf32, #tpu.memory_space<vmem>>, vector<16x128xf32>
    tpu.vector_store %arg6[%c0_13, %c0_14], %18 {strides = array<i32>} : memref<16x128xf32, #tpu.memory_space<vmem>>, vector<16x128xf32>,
    return
  }
  func.func @transform_0(%arg0: i32) -> (i32, i32) {
    %c0_i32 = arith.constant 0 : i32
    %c0_i32_0 = arith.constant 0 : i32
    return %arg0, %c0_i32 : i32, i32
  }
  func.func @transform_1(%arg0: i32) -> (i32, i32) {
    %c0_i32 = arith.constant 0 : i32
    %c0_i32_0 = arith.constant 0 : i32
    %c0_i32_1 = arith.constant 0 : i32
    return %c0_i32, %c0_i32_0 : i32, i32
  }
  func.func @transform_2(%arg0: i32) -> (i32, i32) {
    %c0_i32 = arith.constant 0 : i32
    %c0_i32_0 = arith.constant 0 : i32
    %c0_i32_1 = arith.constant 0 : i32
    return %c0_i32, %c0_i32_0 : i32, i32
  }
  func.func @transform_3(%arg0: i32) -> (i32, i32) {
    %c0_i32 = arith.constant 0 : i32
    %c0_i32_0 = arith.constant 0 : i32
    %c0_i32_1 = arith.constant 0 : i32
    return %c0_i32, %c0_i32_0 : i32, i32
  }
  func.func @transform_4(%arg0: i32) -> (i32, i32) {
    %c0_i32 = arith.constant 0 : i32
    %c0_i32_0 = arith.constant 0 : i32
    %c0_i32_1 = arith.constant 0 : i32
    return %c0_i32, %c0_i32_0 : i32, i32
  }
  func.func @transform_5(%arg0: i32) -> (i32, i32) {
    %c0_i32 = arith.constant 0 : i32
    %c0_i32_0 = arith.constant 0 : i32
    return %arg0, %c0_i32 : i32, i32
  }
}

</mosaic_0001>

<llo_original>
// kernel: tpu_custom_call.1
$region0: #{tpu_custom_call.1}
  #allocation0 [shape = 'u32[]', space=smem, size = 0x4, offset = 0x4, fixed_abs, tag = 'smem constant byte address 0x4 - core index']
  #allocation1 [shape = 'u32[144,128]{1,0:T(1,128)}', space=vmem, size = 0x12000, scoped, tag = 'internal scratch']
  %s0 = inlined_call_operand.hbm [shape: f32[16,128], index: 0, kind: input, shape index: {}]
  %s1 = inlined_call_operand.hbm [shape: f32[128,128], index: 1, kind: input, shape index: {}]
  %s2 = inlined_call_operand.vmem [shape: f32[1,128], index: 2, kind: input, shape index: {}]
  %s3 = inlined_call_operand.hbm [shape: f32[128,128], index: 3, kind: input, shape index: {}]
  %s4 = inlined_call_operand.vmem [shape: f32[1,128], index: 4, kind: input, shape index: {}]
  %s5 = inlined_call_operand.hbm [shape: f32[16,128], index: 5, kind: output, shape index: {}]
  %s6 = sld [smem:[#allocation0]]
  $region42: #{tpu_custom_call.1} parent=0
    _
  %s8 = ssub.s32 1, %s6
  %s9 = scalar_select 0, %s8, %s6
  $region1: #{tpu_custom_call.1} parent=0
    #allocation2 [shape = 'u8[8192]{0}', space=vmem, size = 0x2000, scoped, tag = 'input window, operand 0, single buffered']
    #allocation3 [shape = 's32[1]{0}', space=sflag, size = 0x4, scoped, tag = 'scoped memory for tpu_custom_call.1']
    #allocation4 [shape = 's32[1]{0}', space=sflag, size = 0x4, scoped, tag = 'scoped memory for tpu_custom_call.1']
    #allocation5 [shape = 'u8[65536]{0}', space=vmem, size = 0x10000, scoped, tag = 'input window, operand 1, single buffered']
    #allocation6 [shape = 's32[1]{0}', space=sflag, size = 0x4, scoped, tag = 'scoped memory for tpu_custom_call.1']
    #allocation7 [shape = 'u8[65536]{0}', space=vmem, size = 0x10000, scoped, tag = 'input window, operand 3, single buffered']
    #allocation8 [shape = 'u8[8192]{0}', space=vmem, size = 0x2000, scoped, tag = 'output window, operand 0, single buffered']
    %10 = vsyncpa [#allocation3], 0
    %11 = vsyncpa [#allocation6], 0
    %12 = vsyncpa [#allocation4], 0
    // Predicated region
    $region2: #{tpu_custom_call.1} parent=1 // pred_check
      _
    $region3: #{tpu_custom_call.1} parent=1 // pred_check_branch
      %14 = sbr.rel (0) target = $region5
    $region4: #{tpu_custom_call.1} parent=1 // pred_region
      %s16 = ssub.s32 256, 256
      %17 = vsyncadd [#allocation3], %s16
      %s18 = sshll.u32 [#allocation2], 4
      %s19 = int_to_ptr.vmem [resolvable:$true] %s18
      %24 = dma.hbm_to_vmem [thread:$0]  %s0, 256, %s19, [#allocation3], 128, 128, 8
    $region5: #{tpu_custom_call.1} parent=1 // pred_fallthru
      _
    // Predicated region
    $region6: #{tpu_custom_call.1} parent=1 // pred_check
      _
    $region7: #{tpu_custom_call.1} parent=1 // pred_check_branch
      %26 = sbr.rel (0) target = $region9
    $region8: #{tpu_custom_call.1} parent=1 // pred_region
      %s28 = ssub.s32 2048, 2048
      %29 = vsyncadd [#allocation6], %s28
      %s30 = sshll.u32 [#allocation5], 4
      %s31 = int_to_ptr.vmem [resolvable:$true] %s30
      %36 = dma.hbm_to_vmem [thread:$0]  %s1, 2048, %s31, [#allocation6], 128, 128, 8
    $region9: #{tpu_custom_call.1} parent=1 // pred_fallthru
      _
    // Predicated region
    $region10: #{tpu_custom_call.1} parent=1 // pred_check
      _
    $region11: #{tpu_custom_call.1} parent=1 // pred_check_branch
      %38 = sbr.rel (0) target = $region13
    $region12: #{tpu_custom_call.1} parent=1 // pred_region
      _
    $region13: #{tpu_custom_call.1} parent=1 // pred_fallthru
      _
    // Predicated region
    $region14: #{tpu_custom_call.1} parent=1 // pred_check
      _
    $region15: #{tpu_custom_call.1} parent=1 // pred_check_branch
      %40 = sbr.rel (0) target = $region17
    $region16: #{tpu_custom_call.1} parent=1 // pred_region
      %s42 = ssub.s32 2048, 2048
      %43 = vsyncadd [#allocation6], %s42
      %s44 = sshll.u32 [#allocation7], 4
      %s45 = int_to_ptr.vmem [resolvable:$true] %s44
      %50 = dma.hbm_to_vmem [thread:$0]  %s3, 2048, %s45, [#allocation6], 128, 128, 8
    $region17: #{tpu_custom_call.1} parent=1 // pred_fallthru
      _
    // Predicated region
    $region18: #{tpu_custom_call.1} parent=1 // pred_check
      _
    $region19: #{tpu_custom_call.1} parent=1 // pred_check_branch
      %52 = sbr.rel (0) target = $region21
    $region20: #{tpu_custom_call.1} parent=1 // pred_region
      _
    $region21: #{tpu_custom_call.1} parent=1 // pred_fallthru
      _
    // Predicated region
    $region22: #{tpu_custom_call.1} parent=1 // pred_check
      _
    $region23: #{tpu_custom_call.1} parent=1 // pred_check_branch
      %54 = sbr.rel (0) target = $region25
    $region24: #{tpu_custom_call.1} parent=1 // pred_region
      %55 = dma.done [#allocation3], 256
    $region25: #{tpu_custom_call.1} parent=1 // pred_fallthru
      _
    // Predicated region
    $region26: #{tpu_custom_call.1} parent=1 // pred_check
      _
    $region27: #{tpu_custom_call.1} parent=1 // pred_check_branch
      %57 = sbr.rel (0) target = $region29
    $region28: #{tpu_custom_call.1} parent=1 // pred_region
      %58 = dma.done [#allocation6], 2048
    $region29: #{tpu_custom_call.1} parent=1 // pred_fallthru
      _
    // Predicated region
    $region30: #{tpu_custom_call.1} parent=1 // pred_check
      _
    $region31: #{tpu_custom_call.1} parent=1 // pred_check_branch
      %60 = sbr.rel (0) target = $region33
    $region32: #{tpu_custom_call.1} parent=1 // pred_region
      %61 = dma.done [#allocation6], 2048
    $region33: #{tpu_custom_call.1} parent=1 // pred_fallthru
      _
    %v62 = vld [vmem:[#allocation2] sm:$0xff]
    %v63 = vld [vmem:[#allocation2 + $0x8] sm:$0xff]
    %v64 = vld [vmem:[#allocation5] sm:$0xff]
    %v65 = vld [vmem:[#allocation5 + $0x8] sm:$0xff]
    %v66 = vld [vmem:[#allocation5 + $0x10] sm:$0xff]
    %v67 = vld [vmem:[#allocation5 + $0x18] sm:$0xff]
    %v68 = vld [vmem:[#allocation5 + $0x20] sm:$0xff]
    %v69 = vld [vmem:[#allocation5 + $0x28] sm:$0xff]
    %v70 = vld [vmem:[#allocation5 + $0x30] sm:$0xff]
    %v71 = vld [vmem:[#allocation5 + $0x38] sm:$0xff]
    %v72 = vld [vmem:[#allocation5 + $0x40] sm:$0xff]
    %v73 = vld [vmem:[#allocation5 + $0x48] sm:$0xff]
    %v74 = vld [vmem:[#allocation5 + $0x50] sm:$0xff]
    %v75 = vld [vmem:[#allocation5 + $0x58] sm:$0xff]
    %v76 = vld [vmem:[#allocation5 + $0x60] sm:$0xff]
    %v77 = vld [vmem:[#allocation5 + $0x68] sm:$0xff]
    %v78 = vld [vmem:[#allocation5 + $0x70] sm:$0xff]
    %v79 = vld [vmem:[#allocation5 + $0x78] sm:$0xff]
    %v80 = vld [vmem:[%s2] sm:$0x1]
    %v82 = vlaneseq
    %v83 = vshrl.u32 %v82, 7
    %v84 = vsub.s32 0, %v83
    %v85 = vrot.slane %v80, %v84
    %87 = vmatprep.subr.mxu0 0.0
    %88 = vmatpush1.msra.mxu0 %v79
    %89 = vmatprep.subr.mxu0 0.0
    %90 = vmatpush1.msra.mxu0 %v78
    %91 = vmatprep.subr.mxu0 0.0
    %92 = vmatpush1.msra.mxu0 %v77
    %93 = vmatprep.subr.mxu0 0.0
    %94 = vmatpush1.msra.mxu0 %v76
    %95 = vmatprep.subr.mxu0 0.0
    %96 = vmatpush1.msra.mxu0 %v75
    %97 = vmatprep.subr.mxu0 0.0
    %98 = vmatpush1.msra.mxu0 %v74
    %99 = vmatprep.subr.mxu0 0.0
    %100 = vmatpush1.msra.mxu0 %v73
    %101 = vmatprep.subr.mxu0 0.0
    %102 = vmatpush1.msra.mxu0 %v72
    %103 = vmatprep.subr.mxu0 0.0
    %104 = vmatpush1.msra.mxu0 %v71
    %105 = vmatprep.subr.mxu0 0.0
    %106 = vmatpush1.msra.mxu0 %v70
    %107 = vmatprep.subr.mxu0 0.0
    %108 = vmatpush1.msra.mxu0 %v69
    %109 = vmatprep.subr.mxu0 0.0
    %110 = vmatpush1.msra.mxu0 %v68
    %111 = vmatprep.subr.mxu0 0.0
    %112 = vmatpush1.msra.mxu0 %v67
    %113 = vmatprep.subr.mxu0 0.0
    %114 = vmatpush1.msra.mxu0 %v66
    %115 = vmatprep.subr.mxu0 0.0
    %116 = vmatpush1.msra.mxu0 %v65
    %117 = vmatprep.subr.mxu0 0.0
    %118 = vmatpush1.msra.mxu0 %v64
    %119 = vmatprep.subr.mxu0 0.0
    %120 = vmatpush2.msra.mxu0 0.0
    %121 = vmatprep.subr.mxu0 0.0
    %122 = vmatpush2.msra.mxu0 0.0
    %123 = vmatprep.subr.mxu0 0.0
    %124 = vmatpush2.msra.mxu0 0.0
    %125 = vmatprep.subr.mxu0 0.0
    %126 = vmatpush2.msra.mxu0 0.0
    %127 = vmatprep.subr.mxu0 0.0
    %128 = vmatpush2.msra.mxu0 0.0
    %129 = vmatprep.subr.mxu0 0.0
    %130 = vmatpush2.msra.mxu0 0.0
    %131 = vmatprep.subr.mxu0 0.0
    %132 = vmatpush2.msra.mxu0 0.0
    %133 = vmatprep.subr.mxu0 0.0
    %134 = vmatpush2.msra.mxu0 0.0
    %135 = vmatprep.subr.mxu0 0.0
    %136 = vmatpush2.msra.mxu0 0.0
    %137 = vmatprep.subr.mxu0 0.0
    %138 = vmatpush2.msra.mxu0 0.0
    %139 = vmatprep.subr.mxu0 0.0
    %140 = vmatpush2.msra.mxu0 0.0
    %141 = vmatprep.subr.mxu0 0.0
    %142 = vmatpush2.msra.mxu0 0.0
    %143 = vmatprep.subr.mxu0 0.0
    %144 = vmatpush2.msra.mxu0 0.0
    %145 = vmatprep.subr.mxu0 0.0
    %146 = vmatpush2.msra.mxu0 0.0
    %147 = vmatprep.subr.mxu0 0.0
    %148 = vmatpush2.msra.mxu0 0.0
    %149 = vmatprep.subr.mxu0 0.0
    %150 = vmatpush2.msra.mxu0 0.0
    %151 = vmatprep.mubr.f32.mxu0 0.0
    %152 = vmatmul.mubr.f32.gmra.mxu0 %v62
    %v153 = vpop.f32.mrf.mxu0
    %v154 = vadd.f32 %v85, %v153
    %v155 = vpop.f32.mrf.mxu0
    %156 = vmatprep.mubr.f32.mxu0 0.0
    %157 = vmatmul.mubr.f32.gmra.mxu0 %v63
    %v158 = vpop.f32.mrf.mxu0
    %v159 = vadd.f32 %v85, %v158
    %v160 = vpop.f32.mrf.mxu0
    %161 = vdwg.mxu0
    %v162 = vmul.f32 %v154, 0.5
    %v163 = vmul.f32 %v159, 0.5
    %v164 = vmul.f32 %v154, 0.70710677
    %v165 = vmul.f32 %v159, 0.70710677
    %v166 = verf.f32.pop %v164
    %v167 = verf.f32.pop %v165
    %v168 = vadd.f32 %v166, 1.0
    %v169 = vadd.f32 %v167, 1.0
    %v170 = vmul.f32 %v162, %v168
    %v171 = vmul.f32 %v163, %v169
    %v172 = vld [vmem:[#allocation7] sm:$0xff]
    %v173 = vld [vmem:[#allocation7 + $0x8] sm:$0xff]
    %v174 = vld [vmem:[#allocation7 + $0x10] sm:$0xff]
    %v175 = vld [vmem:[#allocation7 + $0x18] sm:$0xff]
    %v176 = vld [vmem:[#allocation7 + $0x20] sm:$0xff]
    %v177 = vld [vmem:[#allocation7 + $0x28] sm:$0xff]
    %v178 = vld [vmem:[#allocation7 + $0x30] sm:$0xff]
    %v179 = vld [vmem:[#allocation7 + $0x38] sm:$0xff]
    %v180 = vld [vmem:[#allocation7 + $0x40] sm:$0xff]
    %v181 = vld [vmem:[#allocation7 + $0x48] sm:$0xff]
    %v182 = vld [vmem:[#allocation7 + $0x50] sm:$0xff]
    %v183 = vld [vmem:[#allocation7 + $0x58] sm:$0xff]
    %v184 = vld [vmem:[#allocation7 + $0x60] sm:$0xff]
    %v185 = vld [vmem:[#allocation7 + $0x68] sm:$0xff]
    %v186 = vld [vmem:[#allocation7 + $0x70] sm:$0xff]
    %v187 = vld [vmem:[#allocation7 + $0x78] sm:$0xff]
    %v188 = vld [vmem:[%s4] sm:$0x1]
    %v190 = vlaneseq
    %v191 = vshrl.u32 %v190, 7
    %v192 = vsub.s32 0, %v191
    %v193 = vrot.slane %v188, %v192
    %195 = vmatprep.subr.mxu0 0.0
    %196 = vmatpush1.msra.mxu0 %v187
    %197 = vmatprep.subr.mxu0 0.0
    %198 = vmatpush1.msra.mxu0 %v186
    %199 = vmatprep.subr.mxu0 0.0
    %200 = vmatpush1.msra.mxu0 %v185
    %201 = vmatprep.subr.mxu0 0.0
    %202 = vmatpush1.msra.mxu0 %v184
    %203 = vmatprep.subr.mxu0 0.0
    %204 = vmatpush1.msra.mxu0 %v183
    %205 = vmatprep.subr.mxu0 0.0
    %206 = vmatpush1.msra.mxu0 %v182
    %207 = vmatprep.subr.mxu0 0.0
    %208 = vmatpush1.msra.mxu0 %v181
    %209 = vmatprep.subr.mxu0 0.0
    %210 = vmatpush1.msra.mxu0 %v180
    %211 = vmatprep.subr.mxu0 0.0
    %212 = vmatpush1.msra.mxu0 %v179
    %213 = vmatprep.subr.mxu0 0.0
    %214 = vmatpush1.msra.mxu0 %v178
    %215 = vmatprep.subr.mxu0 0.0
    %216 = vmatpush1.msra.mxu0 %v177
    %217 = vmatprep.subr.mxu0 0.0
    %218 = vmatpush1.msra.mxu0 %v176
    %219 = vmatprep.subr.mxu0 0.0
    %220 = vmatpush1.msra.mxu0 %v175
    %221 = vmatprep.subr.mxu0 0.0
    %222 = vmatpush1.msra.mxu0 %v174
    %223 = vmatprep.subr.mxu0 0.0
    %224 = vmatpush1.msra.mxu0 %v173
    %225 = vmatprep.subr.mxu0 0.0
    %226 = vmatpush1.msra.mxu0 %v172
    %227 = vmatprep.subr.mxu0 0.0
    %228 = vmatpush2.msra.mxu0 0.0
    %229 = vmatprep.subr.mxu0 0.0
    %230 = vmatpush2.msra.mxu0 0.0
    %231 = vmatprep.subr.mxu0 0.0
    %232 = vmatpush2.msra.mxu0 0.0
    %233 = vmatprep.subr.mxu0 0.0
    %234 = vmatpush2.msra.mxu0 0.0
    %235 = vmatprep.subr.mxu0 0.0
    %236 = vmatpush2.msra.mxu0 0.0
    %237 = vmatprep.subr.mxu0 0.0
    %238 = vmatpush2.msra.mxu0 0.0
    %239 = vmatprep.subr.mxu0 0.0
    %240 = vmatpush2.msra.mxu0 0.0
    %241 = vmatprep.subr.mxu0 0.0
    %242 = vmatpush2.msra.mxu0 0.0
    %243 = vmatprep.subr.mxu0 0.0
    %244 = vmatpush2.msra.mxu0 0.0
    %245 = vmatprep.subr.mxu0 0.0
    %246 = vmatpush2.msra.mxu0 0.0
    %247 = vmatprep.subr.mxu0 0.0
    %248 = vmatpush2.msra.mxu0 0.0
    %249 = vmatprep.subr.mxu0 0.0
    %250 = vmatpush2.msra.mxu0 0.0
    %251 = vmatprep.subr.mxu0 0.0
    %252 = vmatpush2.msra.mxu0 0.0
    %253 = vmatprep.subr.mxu0 0.0
    %254 = vmatpush2.msra.mxu0 0.0
    %255 = vmatprep.subr.mxu0 0.0
    %256 = vmatpush2.msra.mxu0 0.0
    %257 = vmatprep.subr.mxu0 0.0
    %258 = vmatpush2.msra.mxu0 0.0
    %259 = vmatprep.mubr.f32.mxu0 0.0
    %260 = vmatmul.mubr.f32.gmra.mxu0 %v170
    %v261 = vpop.f32.mrf.mxu0
    %v262 = vadd.f32 %v193, %v261
    %v263 = vpop.f32.mrf.mxu0
    %264 = vmatprep.mubr.f32.mxu0 0.0
    %265 = vmatmul.mubr.f32.gmra.mxu0 %v171
    %v266 = vpop.f32.mrf.mxu0
    %v267 = vadd.f32 %v193, %v266
    %v268 = vpop.f32.mrf.mxu0
    %269 = vdwg.mxu0
    %270 = vst [vmem:[#allocation8] sm:$0xff] %v262
    %271 = vst [vmem:[#allocation8 + $0x8] sm:$0xff] %v267
    // Predicated region
    $region34: #{tpu_custom_call.1} parent=1 // pred_check
      _
    $region35: #{tpu_custom_call.1} parent=1 // pred_check_branch
      %273 = sbr.rel (0) target = $region37
    $region36: #{tpu_custom_call.1} parent=1 // pred_region
      %s275 = ssub.s32 256, 256
      %276 = vsyncadd [#allocation4], %s275
      %s277 = sshll.u32 [#allocation8], 4
      %s278 = int_to_ptr.vmem [resolvable:$true] %s277
      %283 = dma.vmem_to_hbm [thread:$0]  %s278, 256, %s5, [#allocation4], 128, 128, 8
    $region37: #{tpu_custom_call.1} parent=1 // pred_fallthru
      _
    // Predicated region
    $region38: #{tpu_custom_call.1} parent=1 // pred_check
      _
    $region39: #{tpu_custom_call.1} parent=1 // pred_check_branch
      %285 = sbr.rel (0) target = $region41
    $region40: #{tpu_custom_call.1} parent=1 // pred_region
      %286 = dma.done [#allocation4], 256
    $region41: #{tpu_custom_call.1} parent=1 // pred_fallthru
      _
    %287 = vsyncpa [#allocation3], 1
    %288 = vsyncpa [#allocation6], 1
    %289 = vsyncpa [#allocation4], 1

</llo_original>
